<compile_context>
chip_gen: v7x
topology: tpu7x:2x2x1
jax: 0.10.0
libtpu: 0.0.40
codegen_flags: <defaults>
</compile_context>

<pallas_src>
import inspect
import math
from functools import partial

import jax
import jax.numpy as jnp
from jax.experimental import pallas as pl
from jax.experimental.pallas import tpu as pltpu


_INV_SQRT2 = 1.0 / math.sqrt(2.0)

# ---- version-robust feature probes ------------------------------------------
_CompilerParams = getattr(pltpu, "CompilerParams", None)
if _CompilerParams is None:                       # older jax spelling
    _CompilerParams = getattr(pltpu, "TPUCompilerParams")

try:
    _HAS_PIPELINE_MODE = (
        hasattr(pl, "Buffered")
        and "pipeline_mode" in inspect.signature(pl.BlockSpec).parameters
    )
except Exception:  # pragma: no cover
    _HAS_PIPELINE_MODE = False


def _round_up(a, b):
    return (a + b - 1) // b * b


def _physical_vmem_bytes():
    try:
        return int(pltpu.get_tpu_info().vmem_capacity_bytes)
    except Exception:
        return 64 << 20  # conservative fallback: v7x per-TensorCore VMEM


def _device_kind():
    try:
        return jax.devices()[0].device_kind.lower()
    except Exception:
        return ""


def _choose_tf(f_pad, tile_f):
    """Largest multiple of 128 that divides f_pad and is <= tile_f (>=128)."""
    cand = max(128, min(int(tile_f), f_pad))
    cand = (cand // 128) * 128
    while f_pad % cand != 0:
        cand -= 128
    return cand


# ---- kernel ------------------------------------------------------------------
def _geglu_kernel(x_ref, wkv_ref, bkv_ref, ww_ref, bw_ref, o_ref, acc_ref, *, tf):
    j = pl.program_id(1)

    @pl.when(j == 0)
    def _init():
        acc_ref[...] = jnp.zeros_like(acc_ref)

    x = x_ref[...]                                            # (tm, C) bf16
    # single fused up-projection: columns [k_chunk | v_chunk]
    kv = jnp.dot(x, wkv_ref[...], preferred_element_type=jnp.float32) + bkv_ref[...]
    k = kv[:, :tf]
    v = kv[:, tf:]
    # exact (erf) GELU in f32 — matches torch.nn.functional.gelu default
    g = 0.5 * k * (1.0 + jax.lax.erf(k * _INV_SQRT2))
    h = (g * v).astype(jnp.bfloat16)                          # (tm, tf)
    # down-projection chunk, accumulated across the F grid axis
    acc_ref[...] += jnp.dot(h, ww_ref[...], preferred_element_type=jnp.float32)

    @pl.when(j == pl.num_programs(1) - 1)
    def _finalize():
        o_ref[...] = (acc_ref[...] + bw_ref[...]).astype(o_ref.dtype)


# ---- one-time parameter preparation (keep OUT of the per-call hot path) ------
def prepare_geglu_params(params, *, tile_f=512):
    """Cast weights to bf16 once and fuse Wk/Wv (and bk/bv) chunk-interleaved.

    params: wk (C,F), bk (1,F), wv (C,F), bv (1,F), ww (F,C), bw (1,C).
    Returns dict of device arrays plus the static chunk size 'tf'.
    """
    wk, bk = params["wk"], params["bk"]
    wv, bv = params["wv"], params["bv"]
    ww, bw = params["ww"], params["bw"]
    C, Fdim = wk.shape

    # Pad F to a multiple of 128 (exact: gelu(0)*0 == 0, zero Ww rows add 0).
    f_pad = _round_up(Fdim, 128)
    if f_pad != Fdim:
        pf = f_pad - Fdim
        wk = jnp.pad(wk, ((0, 0), (0, pf)))
        wv = jnp.pad(wv, ((0, 0), (0, pf)))
        bk = jnp.pad(bk, ((0, 0), (0, pf)))
        bv = jnp.pad(bv, ((0, 0), (0, pf)))
        ww = jnp.pad(ww, ((0, pf), (0, 0)))

    tf = _choose_tf(f_pad, tile_f)
    nj = f_pad // tf

    # Chunk-interleaved fused layout: [k_chunk0 | v_chunk0 | k_chunk1 | ...]
    wkv = jnp.stack([wk.reshape(C, nj, tf), wv.reshape(C, nj, tf)], axis=2)
    wkv = wkv.reshape(C, 2 * f_pad).astype(jnp.bfloat16)
    bkv = jnp.stack([bk.reshape(nj, tf), bv.reshape(nj, tf)], axis=1)
    bkv = bkv.reshape(1, 2 * f_pad).astype(jnp.float32)

    return {
        "wkv": wkv,                         # (C, 2*F_pad) bf16
        "bkv": bkv,                         # (1, 2*F_pad) f32
        "ww": ww.astype(jnp.bfloat16),      # (F_pad, C)   bf16
        "bw": bw.astype(jnp.float32),       # (1, C)       f32
        "tf": int(tf),                      # static chunk size
        "n_embd": int(C),
        "n_ffn_padded": int(f_pad),
    }


# ---- forward -----------------------------------------------------------------
def geglu_forward(x, wkv, bkv, ww, bw, *, tf, time_shift=False, tile_m=None):
    """x: (B, T, C).  wkv/bkv/ww/bw from prepare_geglu_params; tf is static."""
    B, T, C = x.shape
    out_dtype = x.dtype
    f_pad = ww.shape[0]
    assert wkv.shape[0] == C and wkv.shape[1] == 2 * f_pad
    assert f_pad % tf == 0

    if time_shift:
        # nn.ZeroPad2d((0, 0, 1, -1)) on the first C//2 channels.
        # TODO(synk): fold the one-row time shift into the kernel's x
        # index_map (per-row gather) to avoid materializing a shifted HBM copy.
        half = C // 2
        shifted = jnp.pad(x[:, :, :half], ((0, 0), (1, 0), (0, 0)))[:, :T, :]
        x = jnp.concatenate([shifted, x[:, :, half:]], axis=-1)

    M = B * T
    x2 = x.reshape(M, C)

    # -- generation-aware configuration --------------------------------------
    phys_vmem = _physical_vmem_bytes()
    kind = _device_kind()
    small_vmem = phys_vmem <= (80 << 20)                  # v7x-like (64 MiB/TC)
    is_v5e = ("v5e" in kind) or ("v5 lite" in kind) or ("v5lite" in kind)
    two_core = "v7" in kind                               # 2 TensorCores/chip

    if tile_m is None:
        # Weight-stream amortization ~ tm bf16-flops per weight byte: keep tm
        # above the HBM ridge. 1024 on 128-MiB chips, 512 on 64-MiB chips/v5e.
        tile_m = 512 if (small_vmem or is_v5e) else 1024

    # v5e: weakest HBM BW -> 3-deep weight buffering (if supported).
    weight_bufs = 3 if (is_v5e and _HAS_PIPELINE_MODE) else 2

    tm = _round_up(min(int(tile_m), _round_up(M, 16)), 16)

    # 2-TC chips: keep the parallel M axis >= 2 steps so the 2nd core works.
    if two_core:
        while tm > 16 and pl.cdiv(M, tm) < 2:
            tm = _round_up(tm // 2, 16)

    out_itemsize = jnp.dtype(out_dtype).itemsize

    # Exact per-buffer VMEM sum (no 2x fudge), then fit tm under the cap.
    def _need(tm_):
        return (
            2 * tm_ * C * 2                      # x tile (bf16), double-buffered
            + weight_bufs * C * (2 * tf) * 2     # fused Wk|Wv chunk (bf16)
            + weight_bufs * (2 * tf) * 4         # fused bias chunk (f32)
            + weight_bufs * tf * C * 2           # Ww chunk (bf16)
            + 2 * C * 4                          # bw (f32)
            + 2 * tm_ * C * out_itemsize         # output tile
            + tm_ * C * 4                        # f32 accumulator scratch
            + tm_ * (2 * tf) * 4 + tm_ * tf * 2  # kv f32 + gated bf16 temporaries
        )

    if small_vmem:
        cap = max(phys_vmem - (12 << 20), 24 << 20)   # ~52 MiB on v7x
    else:
        cap = max(min(phys_vmem - (24 << 20), 112 << 20), 24 << 20)  # ~104 MiB

    while tm > 16 and _need(tm) > cap:
        tm = _round_up(tm // 2, 16)

    vmem_limit = int(min(cap, max(_need(tm) + (8 << 20), 32 << 20)))

    M_pad = _round_up(M, tm)
    x2 = x2.astype(jnp.bfloat16)
    if M_pad != M:
        x2 = jnp.pad(x2, ((0, M_pad - M), (0, 0)))

    grid = (M_pad // tm, f_pad // tf)

    # Scheduler hint: weights are re-streamed once per M tile.
    n_m = grid[0]
    cost = pl.CostEstimate(
        flops=6 * M_pad * C * f_pad,
        transcendentals=M_pad * f_pad,
        bytes_accessed=int(
            M_pad * C * 2                       # x (resident over the F axis)
            + n_m * 3 * C * f_pad * 2           # Wkv + Ww re-streamed per M tile
            + M_pad * C * out_itemsize          # output
        ),
    )

    wkw = {"pipeline_mode": pl.Buffered(weight_bufs)} if weight_bufs != 2 else {}

    out = pl.pallas_call(
        partial(_geglu_kernel, tf=tf),
        out_shape=jax.ShapeDtypeStruct((M_pad, C), out_dtype),
        grid_spec=pltpu.PrefetchScalarGridSpec(
            num_scalar_prefetch=0,
            grid=grid,
            in_specs=[
                pl.BlockSpec((tm, C), lambda i, j: (i, 0)),            # x rows
                pl.BlockSpec((C, 2 * tf), lambda i, j: (0, j), **wkw),  # Wk|Wv chunk
                pl.BlockSpec((1, 2 * tf), lambda i, j: (0, j)),         # bk|bv chunk
                pl.BlockSpec((tf, C), lambda i, j: (j, 0), **wkw),      # Ww chunk
                pl.BlockSpec((1, C), lambda i, j: (0, 0)),              # bw
            ],
            out_specs=pl.BlockSpec((tm, C), lambda i, j: (i, 0)),
            scratch_shapes=[pltpu.VMEM((tm, C), jnp.float32)],
        ),
        compiler_params=_CompilerParams(
            dimension_semantics=("parallel", "arbitrary"),
            vmem_limit_bytes=vmem_limit,
        ),
        cost_estimate=cost,
    )(x2, wkv, bkv, ww, bw)

    return out[:M].reshape(B, T, C)


# ---- reference + synthetic init -----------------------------------------------
def init_geglu_params(key, n_embd, n_ffn, dtype=jnp.float32):
    """nn.Linear-shaped params, weights stored transposed: (in, out)."""
    k1, k2, k3, k4, k5, k6 = jax.random.split(key, 6)
    sk = 1.0 / math.sqrt(n_embd)
    sw = 1.0 / math.sqrt(n_ffn)
    return {
        "wk": jax.random.uniform(k1, (n_embd, n_ffn), dtype, -sk, sk),
        "bk": jax.random.uniform(k2, (1, n_ffn), dtype, -sk, sk),
        "wv": jax.random.uniform(k3, (n_embd, n_ffn), dtype, -sk, sk),
        "bv": jax.random.uniform(k4, (1, n_ffn), dtype, -sk, sk),
        "ww": jax.random.uniform(k5, (n_ffn, n_embd), dtype, -sw, sw),
        "bw": jax.random.uniform(k6, (1, n_embd), dtype, -sw, sw),
    }


def geglu_reference(x, params, *, time_shift=False):
    B, T, C = x.shape
    if time_shift:
        half = C // 2
        shifted = jnp.pad(x[:, :, :half], ((0, 0), (1, 0), (0, 0)))[:, :T, :]
        x = jnp.concatenate([shifted, x[:, :, half:]], axis=-1)
    k = x @ params["wk"] + params["bk"][0]
    v = x @ params["wv"] + params["bv"][0]
    g = 0.5 * k * (1.0 + jax.lax.erf(k / math.sqrt(2.0)))
    return (g * v) @ params["ww"] + params["bw"][0]


if __name__ == "__main__":
    n_embd, n_ffn = 32, 64
    B, T = 2, 8

    key = jax.random.PRNGKey(0)
    kx, kp = jax.random.split(key)
    x = jax.random.normal(kx, (B, T, n_embd), jnp.float32)
    params = init_geglu_params(kp, n_embd, n_ffn)

    # One-time weight prep (bf16 cast + Wk/Wv fusion) outside the hot path.
    prep = prepare_geglu_params(params, tile_f=512)

    # no time shift
    fwd = jax.jit(partial(geglu_forward, tf=prep["tf"], time_shift=False))
    y = fwd(x, prep["wkv"], prep["bkv"], prep["ww"], prep["bw"])
    jax.block_until_ready(y)
    y_ref = geglu_reference(x, params, time_shift=False)
    assert y.shape == (B, T, n_embd)
    # bf16 MXU operands -> loosened tolerance vs the pure-f32 reference
    assert jnp.allclose(y, y_ref, atol=5e-2, rtol=5e-2), "mismatch vs reference"

    # with time shift
    fwd_ts = jax.jit(partial(geglu_forward, tf=prep["tf"], time_shift=True))
    y_ts = fwd_ts(x, prep["wkv"], prep["bkv"], prep["ww"], prep["bw"])
    jax.block_until_ready(y_ts)
    y_ts_ref = geglu_reference(x, params, time_shift=True)
    assert jnp.allclose(y_ts, y_ts_ref, atol=5e-2, rtol=5e-2), "mismatch (time_shift)"

    print("KERNEL_OK")
</pallas_src>

<mosaic_0001>
module attributes {stable_mosaic.version = 11 : i64} {
  func.func @_geglu_kernel(%arg0: i32, %arg1: i32, %arg2: memref<16x32xbf16, #tpu.memory_space<vmem>>, %arg3: memref<32x256xbf16, #tpu.memory_space<vmem>>, %arg4: memref<1x256xf32, #tpu.memory_space<vmem>>, %arg5: memref<128x32xbf16, #tpu.memory_space<vmem>>, %arg6: memref<1x32xf32, #tpu.memory_space<vmem>>, %arg7: memref<16x32xf32, #tpu.memory_space<vmem>>, %arg8: memref<16x32xf32, #tpu.memory_space<vmem>>) attributes {dimension_semantics = [#tpu.dimension_semantics<parallel>, #tpu.dimension_semantics<arbitrary>], iteration_bounds = array<i64: 1, 1>, scalar_prefetch = 0 : i64, scratch_operands = 1 : i64, tpu.core_type = #tpu.core_type<tc>, window_params = [{transform_indices = @transform_0, window_bounds = array<i64: 16, 32>}, {transform_indices = @transform_1, window_bounds = array<i64: 32, 256>}, {transform_indices = @transform_2, window_bounds = array<i64: 1, 256>}, {transform_indices = @transform_3, window_bounds = array<i64: 128, 32>}, {pipeline_mode = #tpu.pipeline_mode<synchronous>, transform_indices = @transform_4, window_bounds = array<i64: 1, 32>}, {transform_indices = @transform_5, window_bounds = array<i64: 16, 32>}]} {
    %c0_i32 = arith.constant 0 : i32
    %0 = arith.cmpi eq, %arg1, %c0_i32 : i32
    %1 = arith.extui %0 : i1 to i32
    %c0_i32_0 = arith.constant 0 : i32
    %2 = arith.cmpi ne, %1, %c0_i32_0 : i32
    scf.if %2 {
      %cst_18 = arith.constant 0.000000e+00 : f32
      %29 = vector.broadcast %cst_18 : f32 to vector<16x32xf32>
      %c0_19 = arith.constant 0 : index
      %c0_20 = arith.constant 0 : index
      %30 = vector.load %arg8[%c0_19, %c0_20] : memref<16x32xf32, #tpu.memory_space<vmem>>, vector<16x32xf32>
      tpu.vector_store %arg8[%c0_19, %c0_20], %29 {strides = array<i32>} : memref<16x32xf32, #tpu.memory_space<vmem>>, vector<16x32xf32>,
    } else {
    }
    %c0 = arith.constant 0 : index
    %c0_1 = arith.constant 0 : index
    %3 = vector.load %arg2[%c0, %c0_1] : memref<16x32xbf16, #tpu.memory_space<vmem>>, vector<16x32xbf16>
    %c0_2 = arith.constant 0 : index
    %c0_3 = arith.constant 0 : index
    %4 = vector.load %arg3[%c0_2, %c0_3] : memref<32x256xbf16, #tpu.memory_space<vmem>>, vector<32x256xbf16>
    %cst = arith.constant dense<0.000000e+00> : vector<16x256xf32>
    %5 = tpu.matmul %3, %4, %cst {dimension_numbers = #tpu.dot_dimension_numbers<[1], [0], [0], [1], [0, 0, 1, 1], [], []>} : vector<16x32xbf16>, vector<32x256xbf16>, vector<16x256xf32> -> vector<16x256xf32>
    %c0_4 = arith.constant 0 : index
    %c0_5 = arith.constant 0 : index
    %6 = vector.load %arg4[%c0_4, %c0_5] : memref<1x256xf32, #tpu.memory_space<vmem>>, vector<1x256xf32>
    %7 = vector.broadcast %6 : vector<1x256xf32> to vector<16x256xf32>
    %8 = arith.addf %5, %7 : vector<16x256xf32>
    %9 = vector.extract_strided_slice %8 {offsets = [0, 0], sizes = [16, 128], strides = [1, 1]} : vector<16x256xf32> to vector<16x128xf32>
    %10 = vector.extract_strided_slice %8 {offsets = [0, 128], sizes = [16, 128], strides = [1, 1]} : vector<16x256xf32> to vector<16x128xf32>
    %cst_6 = arith.constant 5.000000e-01 : f32
    %11 = vector.broadcast %cst_6 : f32 to vector<16x128xf32>
    %12 = arith.mulf %11, %9 : vector<16x128xf32>
    %cst_7 = arith.constant 0.707106769 : f32
    %13 = vector.broadcast %cst_7 : f32 to vector<16x128xf32>
    %14 = arith.mulf %9, %13 : vector<16x128xf32>
    %15 = math.erf %14 : vector<16x128xf32>
    %cst_8 = arith.constant 1.000000e+00 : f32
    %16 = vector.broadcast %cst_8 : f32 to vector<16x128xf32>
    %17 = arith.addf %16, %15 : vector<16x128xf32>
    %18 = arith.mulf %12, %17 : vector<16x128xf32>
    %19 = arith.mulf %18, %10 : vector<16x128xf32>
    %20 = arith.truncf %19 : vector<16x128xf32> to vector<16x128xbf16>
    %c0_9 = arith.constant 0 : index
    %c0_10 = arith.constant 0 : index
    %21 = vector.load %arg8[%c0_9, %c0_10] : memref<16x32xf32, #tpu.memory_space<vmem>>, vector<16x32xf32>
    %c0_11 = arith.constant 0 : index
    %c0_12 = arith.constant 0 : index
    %22 = vector.load %arg5[%c0_11, %c0_12] : memref<128x32xbf16, #tpu.memory_space<vmem>>, vector<128x32xbf16>
    %cst_13 = arith.constant dense<0.000000e+00> : vector<16x32xf32>
    %23 = tpu.matmul %20, %22, %cst_13 {dimension_numbers = #tpu.dot_dimension_numbers<[1], [0], [0], [1], [0, 0, 1, 1], [], []>} : vector<16x128xbf16>, vector<128x32xbf16>, vector<16x32xf32> -> vector<16x32xf32>
    %24 = arith.addf %21, %23 : vector<16x32xf32>
    %c0_14 = arith.constant 0 : index
    %c0_15 = arith.constant 0 : index
    %25 = vector.load %arg8[%c0_14, %c0_15] : memref<16x32xf32, #tpu.memory_space<vmem>>, vector<16x32xf32>
    tpu.vector_store %arg8[%c0_14, %c0_15], %24 {strides = array<i32>} : memref<16x32xf32, #tpu.memory_space<vmem>>, vector<16x32xf32>,
    %c0_i32_16 = arith.constant 0 : i32
    %26 = arith.cmpi eq, %arg1, %c0_i32_16 : i32
    %27 = arith.extui %26 : i1 to i32
    %c0_i32_17 = arith.constant 0 : i32
    %28 = arith.cmpi ne, %27, %c0_i32_17 : i32
    scf.if %28 {
      %c0_18 = arith.constant 0 : index
      %c0_19 = arith.constant 0 : index
      %29 = vector.load %arg8[%c0_18, %c0_19] : memref<16x32xf32, #tpu.memory_space<vmem>>, vector<16x32xf32>
      %c0_20 = arith.constant 0 : index
      %c0_21 = arith.constant 0 : index
      %30 = vector.load %arg6[%c0_20, %c0_21] : memref<1x32xf32, #tpu.memory_space<vmem>>, vector<1x32xf32>
      %31 = vector.broadcast %30 : vector<1x32xf32> to vector<16x32xf32>
      %32 = arith.addf %29, %31 : vector<16x32xf32>
      %c0_22 = arith.constant 0 : index
      %c0_23 = arith.constant 0 : index
      %33 = vector.load %arg7[%c0_22, %c0_23] : memref<16x32xf32, #tpu.memory_space<vmem>>, vector<16x32xf32>
      tpu.vector_store %arg7[%c0_22, %c0_23], %32 {strides = array<i32>} : memref<16x32xf32, #tpu.memory_space<vmem>>, vector<16x32xf32>,
    } else {
    }
    return
  }
  func.func @transform_0(%arg0: i32, %arg1: i32) -> (i32, i32) {
    %c0_i32 = arith.constant 0 : i32
    %c0_i32_0 = arith.constant 0 : i32
    return %arg0, %c0_i32 : i32, i32
  }
  func.func @transform_1(%arg0: i32, %arg1: i32) -> (i32, i32) {
    %c0_i32 = arith.constant 0 : i32
    %c0_i32_0 = arith.constant 0 : i32
    return %c0_i32, %arg1 : i32, i32
  }
  func.func @transform_2(%arg0: i32, %arg1: i32) -> (i32, i32) {
    %c0_i32 = arith.constant 0 : i32
    %c0_i32_0 = arith.constant 0 : i32
    return %c0_i32, %arg1 : i32, i32
  }
  func.func @transform_3(%arg0: i32, %arg1: i32) -> (i32, i32) {
    %c0_i32 = arith.constant 0 : i32
    %c0_i32_0 = arith.constant 0 : i32
    return %arg1, %c0_i32 : i32, i32
  }
  func.func @transform_4(%arg0: i32, %arg1: i32) -> (i32, i32) {
    %c0_i32 = arith.constant 0 : i32
    %c0_i32_0 = arith.constant 0 : i32
    %c0_i32_1 = arith.constant 0 : i32
    return %c0_i32, %c0_i32_0 : i32, i32
  }
  func.func @transform_5(%arg0: i32, %arg1: i32) -> (i32, i32) {
    %c0_i32 = arith.constant 0 : i32
    %c0_i32_0 = arith.constant 0 : i32
    return %arg0, %c0_i32 : i32, i32
  }
}

</mosaic_0001>

<llo_original>
// kernel: geglu_forward.1
$region0: #{geglu_forward.1}
  #allocation0 [shape = 'u32[]', space=smem, size = 0x4, offset = 0x4, fixed_abs, tag = 'smem constant byte address 0x4 - core index']
  #allocation1 [shape = 'u32[144,128]{1,0:T(1,128)}', space=vmem, size = 0x12000, scoped, tag = 'internal scratch']
  #allocation2 [shape = 'f32[16,32]{1,0:T(8,128)}', space=vmem, size = 0x2000, scoped, tag = 'scratch operand']
  %s0 = inlined_call_operand.vmem [shape: bf16[16,32], index: 0, kind: input, shape index: {}]
  %s1 = inlined_call_operand.vmem [shape: bf16[32,256], index: 1, kind: input, shape index: {}]
  %s2 = inlined_call_operand.vmem [shape: f32[1,256], index: 2, kind: input, shape index: {}]
  %s3 = inlined_call_operand.vmem [shape: bf16[128,32], index: 3, kind: input, shape index: {}]
  %s4 = inlined_call_operand.vmem [shape: f32[1,32], index: 4, kind: input, shape index: {}]
  %s5 = inlined_call_operand.hbm [shape: f32[16,32], index: 5, kind: output, shape index: {}]
  %s6 = sld [smem:[#allocation0]]
  $region38: #{geglu_forward.1} parent=0
    _
  %s8 = ssub.s32 1, %s6
  %s9 = scalar_select 0, %s8, %s6
  $region1: #{geglu_forward.1} parent=0
    #allocation3 [shape = 'u8[8192]{0}', space=vmem, size = 0x2000, scoped, tag = 'output window, operand 0, single buffered']
    #allocation4 [shape = 's32[1]{0}', space=sflag, size = 0x4, scoped, tag = 'scoped memory for geglu_forward.1']
    %10 = vsyncpa [#allocation4], 0
    // Predicated region
    $region2: #{geglu_forward.1} parent=1 // pred_check
      _
    $region3: #{geglu_forward.1} parent=1 // pred_check_branch
      %12 = sbr.rel (0) target = $region5
    $region4: #{geglu_forward.1} parent=1 // pred_region
      _
    $region5: #{geglu_forward.1} parent=1 // pred_fallthru
      _
    // Predicated region
    $region6: #{geglu_forward.1} parent=1 // pred_check
      _
    $region7: #{geglu_forward.1} parent=1 // pred_check_branch
      %14 = sbr.rel (0) target = $region9
    $region8: #{geglu_forward.1} parent=1 // pred_region
      _
    $region9: #{geglu_forward.1} parent=1 // pred_fallthru
      _
    // Predicated region
    $region10: #{geglu_forward.1} parent=1 // pred_check
      _
    $region11: #{geglu_forward.1} parent=1 // pred_check_branch
      %16 = sbr.rel (0) target = $region13
    $region12: #{geglu_forward.1} parent=1 // pred_region
      _
    $region13: #{geglu_forward.1} parent=1 // pred_fallthru
      _
    // Predicated region
    $region14: #{geglu_forward.1} parent=1 // pred_check
      _
    $region15: #{geglu_forward.1} parent=1 // pred_check_branch
      %18 = sbr.rel (0) target = $region17
    $region16: #{geglu_forward.1} parent=1 // pred_region
      _
    $region17: #{geglu_forward.1} parent=1 // pred_fallthru
      _
    // Predicated region
    $region18: #{geglu_forward.1} parent=1 // pred_check
      _
    $region19: #{geglu_forward.1} parent=1 // pred_check_branch
      %20 = sbr.rel (0) target = $region21
    $region20: #{geglu_forward.1} parent=1 // pred_region
      _
    $region21: #{geglu_forward.1} parent=1 // pred_fallthru
      _
    %p22 = scmp.eq.s32.totalorder 0, 0
    // Predicated region
    $region22: #{geglu_forward.1} parent=1 // pred_check
      %p23 = pneg %p22
    $region23: #{geglu_forward.1} parent=1 // pred_check_branch
      %25 = sbr.rel (%p23) target = $region25
    $region24: #{geglu_forward.1} parent=1 // pred_region
      %vm26 = vcmask 261120
      %27 = vst.msk [vmem:[#allocation2] sm:$0xff] %vm26, 0.0
      %28 = vst.msk [vmem:[#allocation2 + $0x8] sm:$0xff] %vm26, 0.0
    $region25: #{geglu_forward.1} parent=1 // pred_fallthru
      _
    %v29 = vld [vmem:[%s0] sm:$0xf]
    %v30 = vld [vmem:[%s0 + $0x4] sm:$0xf]
    %v31 = vld [vmem:[%s1] sm:$0xff]
    %v32 = vld [vmem:[%s1 + $0x8] sm:$0xff]
    %v33 = vld [vmem:[%s1 + $0x10] sm:$0xff]
    %v34 = vld [vmem:[%s1 + $0x18] sm:$0xff]
    %v35 = vld [vmem:[%s2] sm:$0x3]
    %v37 = vlaneseq
    %v38 = vshrl.u32 %v37, 7
    %v39 = vsub.s32 0, %v38
    %v40 = vrot.slane %v35, %v39
    %v41 = vlaneseq
    %v42 = vshrl.u32 %v41, 7
    %v43 = vsub.s32 1, %v42
    %v44 = vrot.slane %v35, %v43
    %v49 = vunpack.c.l.b16 %v29
    %v50 = vunpack.c.l.b16 %v30
    %v51 = vpack.c.b16 %v50, %v49
    %v56 = vunpack.c.l.b16 %v31
    %v57 = vunpack.c.h.b16 %v31
    %v58 = vunpack.c.l.b16 %v32
    %v59 = vunpack.c.h.b16 %v32
    %v60 = vunpack.c.l.b16 %v33
    %v61 = vunpack.c.h.b16 %v33
    %v62 = vunpack.c.l.b16 %v34
    %v63 = vunpack.c.h.b16 %v34
    %v64 = vpack.c.b16 %v58, %v56
    %v65 = vpack.c.b16 %v59, %v57
    %v66 = vpack.c.b16 %v62, %v60
    %v67 = vpack.c.b16 %v63, %v61
    %vm72 = vcmask 261120
    %v74 = vsel %vm72, %v51, 0
    %76 = vmatprep.subr.bf16.mxu0 %v65
    %77 = vmatpush1.bf16.msra.mxu0 %v64
    %78 = vmatprep.subr.bf16.mxu0 %v67
    %79 = vmatpush1.bf16.msra.mxu0 %v66
    %80 = vmatprep.subr.bf16.mxu0 0
    %81 = vmatpush1.bf16.msra.mxu0 0
    %82 = vmatprep.subr.bf16.mxu0 0
    %83 = vmatpush1.bf16.msra.mxu0 0
    %84 = vmatprep.subr.bf16.mxu0 0
    %85 = vmatpush1.bf16.msra.mxu0 0
    %86 = vmatprep.subr.bf16.mxu0 0
    %87 = vmatpush1.bf16.msra.mxu0 0
    %88 = vmatprep.subr.bf16.mxu0 0
    %89 = vmatpush1.bf16.msra.mxu0 0
    %90 = vmatprep.subr.bf16.mxu0 0
    %91 = vmatpush1.bf16.msra.mxu0 0
    %92 = vmatprep.subr.bf16.mxu0 0
    %93 = vmatpush1.bf16.msra.mxu0 0
    %94 = vmatprep.subr.bf16.mxu0 0
    %95 = vmatpush1.bf16.msra.mxu0 0
    %96 = vmatprep.subr.bf16.mxu0 0
    %97 = vmatpush1.bf16.msra.mxu0 0
    %98 = vmatprep.subr.bf16.mxu0 0
    %99 = vmatpush1.bf16.msra.mxu0 0
    %100 = vmatprep.subr.bf16.mxu0 0
    %101 = vmatpush1.bf16.msra.mxu0 0
    %102 = vmatprep.subr.bf16.mxu0 0
    %103 = vmatpush1.bf16.msra.mxu0 0
    %104 = vmatprep.subr.bf16.mxu0 0
    %105 = vmatpush1.bf16.msra.mxu0 0
    %106 = vmatprep.subr.bf16.mxu0 0
    %107 = vmatpush1.bf16.msra.mxu0 0
    %108 = vmatprep.mubr.bf16.mxu0 0
    %109 = vmatmul.mubr.bf16.gmra.mrb[0].mxu0 %v74
    %v110 = vpop.f32.mrb[0].mxu0
    %v111 = vadd.f32 %v40, %v110
    %v112 = vpop.f32.mrb[0].mxu0
    %v113 = vadd.f32 %v44, %v112
    %v114 = vpop.f32.mrb[0].mxu0
    %v115 = vadd.f32 %v40, %v114
    %v116 = vpop.f32.mrb[0].mxu0
    %v117 = vadd.f32 %v44, %v116
    %118 = vdwg.mxu0
    %v119 = vmul.f32 %v111, 0.5
    %v120 = vmul.f32 %v115, 0.5
    %v121 = vmul.f32 %v111, 0.70710677
    %v122 = vmul.f32 %v115, 0.70710677
    %v123 = verf.f32.pop %v121
    %v124 = verf.f32.pop %v122
    %v125 = vadd.f32 %v123, 1.0
    %v126 = vadd.f32 %v124, 1.0
    %v127 = vmul.f32 %v119, %v125
    %v128 = vmul.f32 %v120, %v126
    %v129 = vmul.f32 %v127, %v113
    %v130 = vmul.f32 %v128, %v117
    %v131 = vpack.c.bf16 %v130, %v129
    %v132 = vld [vmem:[#allocation2] sm:$0xff]
    %v133 = vld [vmem:[#allocation2 + $0x8] sm:$0xff]
    %v134 = vld [vmem:[%s3] sm:$0xf]
    %v135 = vld [vmem:[%s3 + $0x4] sm:$0xf]
    %v136 = vld [vmem:[%s3 + $0x8] sm:$0xf]
    %v137 = vld [vmem:[%s3 + $0xc] sm:$0xf]
    %v138 = vld [vmem:[%s3 + $0x10] sm:$0xf]
    %v139 = vld [vmem:[%s3 + $0x14] sm:$0xf]
    %v140 = vld [vmem:[%s3 + $0x18] sm:$0xf]
    %v141 = vld [vmem:[%s3 + $0x1c] sm:$0xf]
    %v142 = vld [vmem:[%s3 + $0x20] sm:$0xf]
    %v143 = vld [vmem:[%s3 + $0x24] sm:$0xf]
    %v144 = vld [vmem:[%s3 + $0x28] sm:$0xf]
    %v145 = vld [vmem:[%s3 + $0x2c] sm:$0xf]
    %v146 = vld [vmem:[%s3 + $0x30] sm:$0xf]
    %v147 = vld [vmem:[%s3 + $0x34] sm:$0xf]
    %v148 = vld [vmem:[%s3 + $0x38] sm:$0xf]
    %v149 = vld [vmem:[%s3 + $0x3c] sm:$0xf]
    %v166 = vunpack.c.l.b16 %v134
    %v167 = vunpack.c.l.b16 %v135
    %v168 = vunpack.c.l.b16 %v136
    %v169 = vunpack.c.l.b16 %v137
    %v170 = vunpack.c.l.b16 %v138
    %v171 = vunpack.c.l.b16 %v139
    %v172 = vunpack.c.l.b16 %v140
    %v173 = vunpack.c.l.b16 %v141
    %v174 = vunpack.c.l.b16 %v142
    %v175 = vunpack.c.l.b16 %v143
    %v176 = vunpack.c.l.b16 %v144
    %v177 = vunpack.c.l.b16 %v145
    %v178 = vunpack.c.l.b16 %v146
    %v179 = vunpack.c.l.b16 %v147
    %v180 = vunpack.c.l.b16 %v148
    %v181 = vunpack.c.l.b16 %v149
    %v182 = vpack.c.b16 %v167, %v166
    %v183 = vpack.c.b16 %v169, %v168
    %v184 = vpack.c.b16 %v171, %v170
    %v185 = vpack.c.b16 %v173, %v172
    %v186 = vpack.c.b16 %v175, %v174
    %v187 = vpack.c.b16 %v177, %v176
    %v188 = vpack.c.b16 %v179, %v178
    %v189 = vpack.c.b16 %v181, %v180
    %198 = vmatprep.subr.bf16.mxu0 0
    %199 = vmatpush1.bf16.msra.mxu0 %v182
    %200 = vmatprep.subr.bf16.mxu0 0
    %201 = vmatpush1.bf16.msra.mxu0 %v183
    %202 = vmatprep.subr.bf16.mxu0 0
    %203 = vmatpush1.bf16.msra.mxu0 %v184
    %204 = vmatprep.subr.bf16.mxu0 0
    %205 = vmatpush1.bf16.msra.mxu0 %v185
    %206 = vmatprep.subr.bf16.mxu0 0
    %207 = vmatpush1.bf16.msra.mxu0 %v186
    %208 = vmatprep.subr.bf16.mxu0 0
    %209 = vmatpush1.bf16.msra.mxu0 %v187
    %210 = vmatprep.subr.bf16.mxu0 0
    %211 = vmatpush1.bf16.msra.mxu0 %v188
    %212 = vmatprep.subr.bf16.mxu0 0
    %213 = vmatpush1.bf16.msra.mxu0 %v189
    %214 = vmatprep.subr.bf16.mxu0 0
    %215 = vmatpush1.bf16.msra.mxu0 0
    %216 = vmatprep.subr.bf16.mxu0 0
    %217 = vmatpush1.bf16.msra.mxu0 0
    %218 = vmatprep.subr.bf16.mxu0 0
    %219 = vmatpush1.bf16.msra.mxu0 0
    %220 = vmatprep.subr.bf16.mxu0 0
    %221 = vmatpush1.bf16.msra.mxu0 0
    %222 = vmatprep.subr.bf16.mxu0 0
    %223 = vmatpush1.bf16.msra.mxu0 0
    %224 = vmatprep.subr.bf16.mxu0 0
    %225 = vmatpush1.bf16.msra.mxu0 0
    %226 = vmatprep.subr.bf16.mxu0 0
    %227 = vmatpush1.bf16.msra.mxu0 0
    %228 = vmatprep.subr.bf16.mxu0 0
    %229 = vmatpush1.bf16.msra.mxu0 0
    %230 = vmatprep.mubr.bf16.mxu0 0
    %231 = vmatmul.mubr.bf16.gmra.mrb[0].mxu0 %v131
    %v232 = vpop.f32.mrb[0].mxu0
    %v233 = vadd.f32 0.0, %v232
    %v234 = vpop.f32.mrb[0].mxu0
    %v235 = vpop.f32.mrb[0].mxu0
    %v236 = vadd.f32 0.0, %v235
    %v237 = vpop.f32.mrb[0].mxu0
    %238 = vdwg.mxu0
    %v239 = vadd.f32 %v132, %v233
    %v240 = vadd.f32 %v133, %v236
    %241 = vst.msk [vmem:[#allocation2] sm:$0xff] %vm72, %v239
    %242 = vst.msk [vmem:[#allocation2 + $0x8] sm:$0xff] %vm72, %v240
    // Predicated region
    $region26: #{geglu_forward.1} parent=1 // pred_check
      %p243 = pneg %p22
    $region27: #{geglu_forward.1} parent=1 // pred_check_branch
      %245 = sbr.rel (%p243) target = $region29
    $region28: #{geglu_forward.1} parent=1 // pred_region
      %v246 = vld [vmem:[#allocation2] sm:$0xff]
      %v247 = vld [vmem:[#allocation2 + $0x8] sm:$0xff]
      %v248 = vld [vmem:[%s4] sm:$0x1]
      %v250 = vlaneseq
      %v251 = vshrl.u32 %v250, 7
      %v252 = vsub.s32 0, %v251
      %v253 = vrot.slane %v248, %v252
      %v255 = vadd.f32 %v246, %v253
      %v256 = vadd.f32 %v247, %v253
      %257 = vst.msk [vmem:[#allocation3] sm:$0xff] %vm72, %v255
      %258 = vst.msk [vmem:[#allocation3 + $0x8] sm:$0xff] %vm72, %v256
    $region29: #{geglu_forward.1} parent=1 // pred_fallthru
      _
    // Predicated region
    $region30: #{geglu_forward.1} parent=1 // pred_check
      _
    $region31: #{geglu_forward.1} parent=1 // pred_check_branch
      %260 = sbr.rel (0) target = $region33
    $region32: #{geglu_forward.1} parent=1 // pred_region
      %s262 = ssub.s32 256, 256
      %263 = vsyncadd [#allocation4], %s262
      %s264 = sshll.u32 [#allocation3], 4
      %s265 = int_to_ptr.vmem [resolvable:$true] %s264
      %270 = dma.vmem_to_hbm [thread:$0]  %s265, 256, %s5, [#allocation4], 128, 128, 8
    $region33: #{geglu_forward.1} parent=1 // pred_fallthru
      _
    // Predicated region
    $region34: #{geglu_forward.1} parent=1 // pred_check
      _
    $region35: #{geglu_forward.1} parent=1 // pred_check_branch
      %272 = sbr.rel (0) target = $region37
    $region36: #{geglu_forward.1} parent=1 // pred_region
      %273 = dma.done [#allocation4], 256
    $region37: #{geglu_forward.1} parent=1 // pred_fallthru
      _
    %274 = vsyncpa [#allocation4], 1

</llo_original>
